<compile_context>
chip_gen: v6e
topology: v6e:2x2x1
jax: 0.10.0
libtpu: 0.0.40
codegen_flags: <defaults>
</compile_context>

<pallas_src>
import jax
import jax.numpy as jnp
import numpy as np
from jax.experimental import pallas as pl
from jax.experimental.pallas import tpu as pltpu

N_BINS = 15
N_BINS_PAD = 16  # lane-friendly padding; bin 15 is never populated by valid samples


def _make_kernel(n_total, n_bins=N_BINS):
    """Per-tile kernel closed over the true (unpadded) sample count."""

    def kernel(logits_ref, labels_ref, hist_ref):
        pid = pl.program_id(0)

        @pl.when(pid == 0)
        def _init():
            hist_ref[...] = jnp.zeros_like(hist_ref)

        logits = logits_ref[...].astype(jnp.float32)   # (TN, C) samples on sublanes
        labels = labels_ref[...]                       # (TN, 1) int32
        tn, c = logits.shape

        # confidence = max softmax prob = 1 / sum(exp(x - max)); no full softmax.
        row_max = jnp.max(logits, axis=1, keepdims=True)                       # (TN, 1)
        denom = jnp.sum(jnp.exp(logits - row_max), axis=1, keepdims=True)      # (TN, 1)
        conf = pl.reciprocal(denom)                                            # (TN, 1)

        # prediction = first argmax of the logits (same tie-breaking as torch.max).
        cls_idx = jax.lax.broadcasted_iota(jnp.int32, (tn, c), 1).astype(jnp.float32)
        pred = jnp.min(jnp.where(logits == row_max, cls_idx, jnp.float32(c)),
                       axis=1, keepdims=True)                                  # (TN, 1)
        acc = (pred == labels.astype(jnp.float32)).astype(jnp.float32)         # (TN, 1)

        # Bin index = number of boundaries b/15 (b = 1..14) strictly below conf.
        # Exactly matches the (lower, upper] compare chain of the reference.
        bin_idx = jnp.zeros((tn, 1), jnp.int32)
        for b in range(1, n_bins):
            bin_idx = bin_idx + (conf > jnp.float32(b / n_bins)).astype(jnp.int32)

        # Ragged-tail mask: rows beyond n_total hold unspecified data (no pad in
        # the wrapper).  Route them to a bin that doesn't exist and zero their
        # contributions so garbage NaN/Inf can never reach the accumulators.
        row = jax.lax.broadcasted_iota(jnp.int32, (tn, 1), 0)
        valid = (pid * tn + row) < n_total
        conf = jnp.where(valid, conf, 0.0)
        acc = jnp.where(valid, acc, 0.0)
        bin_idx = jnp.where(valid, bin_idx, N_BINS_PAD)

        # One-hot histogram: bins ride the lane axis; three sublane reductions.
        cols = jax.lax.broadcasted_iota(jnp.int32, (tn, N_BINS_PAD), 1)
        onehot = (cols == bin_idx).astype(jnp.float32)                         # (TN, 16)

        partial = jnp.concatenate(
            [jnp.sum(onehot, axis=0, keepdims=True),          # per-bin count
             jnp.sum(onehot * conf, axis=0, keepdims=True),   # per-bin sum(conf)
             jnp.sum(onehot * acc, axis=0, keepdims=True)],   # per-bin sum(acc)
            axis=0)                                                            # (3, 16)
        hist_ref[...] += partial

    return kernel


def _auto_tile(n, c, itemsize):
    """Pick samples-per-tile: ~2 MiB lane-padded f32 working set, <= 4 MiB DMA block."""
    c_pad = ((max(c, 1) + 127) // 128) * 128
    tile = (2 * 1024 * 1024) // (4 * c_pad)            # padded f32 intermediate budget
    tile = min(tile, (4 * 1024 * 1024) // max(1, itemsize * c))   # raw block budget
    tile = max(8, (tile // 8) * 8)                     # sublane alignment
    return n if tile >= n else tile


def calibration_error(logits, labels, *, tile_n=None):
    """logits: (N, C) float, labels: (N,) int -> (ece shape (1,), mce scalar)."""
    n, c = logits.shape
    itemsize = int(np.dtype(logits.dtype).itemsize)

    # Only layout plumbing: labels get a trailing unit dim (free); logits are fed
    # to the kernel untouched (no transpose, no pad, no dtype cast in the wrapper).
    labels2d = labels.astype(jnp.int32).reshape(n, 1)

    if tile_n is None:
        tile = _auto_tile(n, c, itemsize)
    else:
        tile = min(int(tile_n), n)
        if tile < n:
            tile = max(8, (tile // 8) * 8)

    grid = (pl.cdiv(n, tile),)

    hist = pl.pallas_call(
        _make_kernel(n),
        out_shape=jax.ShapeDtypeStruct((3, N_BINS_PAD), jnp.float32),
        grid=grid,
        in_specs=[
            pl.BlockSpec((tile, c), lambda i: (i, 0)),   # logits (TN, C)
            pl.BlockSpec((tile, 1), lambda i: (i, 0)),   # labels (TN, 1)
        ],
        # Same block every step -> resident per-bin accumulator across the grid.
        out_specs=pl.BlockSpec((3, N_BINS_PAD), lambda i: (0, 0)),
        # Reduction over N is a sequential accumulator chain ("arbitrary").
        # A v7x 2-TC split would add a leading parallel axis with per-core
        # (3, 16) partial blocks combined in the wrapper epilogue below.
        compiler_params=pltpu.CompilerParams(
            dimension_semantics=("arbitrary",),
            vmem_limit_bytes=32 * 1024 * 1024),
        cost_estimate=pl.CostEstimate(
            flops=int(6 * n * c),
            transcendentals=int(n * c),
            bytes_accessed=int(n * c * itemsize + n * 4 + 3 * N_BINS_PAD * 4)),
    )(logits, labels2d)

    # 16-element finish in the wrapper (negligible XLA work).
    count = hist[0, :N_BINS]
    sconf = hist[1, :N_BINS]
    sacc = hist[2, :N_BINS]
    safe = jnp.maximum(count, 1.0)
    gap = jnp.abs(sconf / safe - sacc / safe)
    populated = count > 0.0
    ece = jnp.sum(jnp.where(populated, gap * (count / jnp.float32(n)), 0.0))
    mce = jnp.max(jnp.where(populated, gap, -1.0))
    mce = jnp.where(mce < 0.0, jnp.float32(1.0), mce)   # torch.tensor([1]) fallback
    return ece.reshape(1), mce


def _reference(logits, labels, n_bins=N_BINS):
    """Pure JAX/NumPy reference mirroring the PyTorch forward."""
    probs = jax.nn.softmax(logits, axis=1)
    conf = np.asarray(jnp.max(probs, axis=1))
    pred = np.asarray(jnp.argmax(probs, axis=1))
    acc = (pred == np.asarray(labels)).astype(np.float32)
    ece = 0.0
    gaps = []
    for b in range(n_bins):
        lo, hi = b / n_bins, (b + 1) / n_bins
        in_bin = (conf > lo) & (conf <= hi)
        prop = in_bin.mean()
        if prop > 0:
            gap = abs(float(conf[in_bin].mean()) - float(acc[in_bin].mean()))
            ece += gap * prop
            gaps.append(gap)
    mce = max(gaps) if gaps else 1.0
    return np.float32(ece), np.float32(mce)


if __name__ == "__main__":
    key = jax.random.PRNGKey(0)

    # Case 1: single block (tile == N).
    k1, k2 = jax.random.split(key)
    N, C = 64, 8
    logits = jax.random.normal(k1, (N, C), dtype=jnp.float32) * 2.0
    labels = jax.random.randint(k2, (N,), 0, C, dtype=jnp.int32)

    ece, mce = calibration_error(logits, labels)
    jax.block_until_ready((ece, mce))
    ref_ece, ref_mce = _reference(logits, labels)
    np.testing.assert_allclose(np.asarray(ece)[0], ref_ece, rtol=1e-4, atol=1e-5)
    np.testing.assert_allclose(np.asarray(mce), ref_mce, rtol=1e-4, atol=1e-5)

    # Case 2: multi-tile grid with a ragged trailing block (no padding) —
    # exercises the accumulator chain and the in-kernel valid-tail mask.
    k3, k4 = jax.random.split(k2)
    N2, C2 = 650, 10
    logits2 = jax.random.normal(k3, (N2, C2), dtype=jnp.float32) * 1.5
    labels2 = jax.random.randint(k4, (N2,), 0, C2, dtype=jnp.int32)

    ece2, mce2 = calibration_error(logits2, labels2, tile_n=256)
    jax.block_until_ready((ece2, mce2))
    ref_ece2, ref_mce2 = _reference(logits2, labels2)
    np.testing.assert_allclose(np.asarray(ece2)[0], ref_ece2, rtol=1e-4, atol=1e-5)
    np.testing.assert_allclose(np.asarray(mce2), ref_mce2, rtol=1e-4, atol=1e-5)

    print("KERNEL_OK")
</pallas_src>

<mosaic_0001>
module attributes {stable_mosaic.version = 11 : i64} {
  func.func @kernel(%arg0: i32, %arg1: memref<64x8xf32, #tpu.memory_space<vmem>>, %arg2: memref<64x1xi32, #tpu.memory_space<vmem>>, %arg3: memref<3x16xf32, #tpu.memory_space<vmem>>) attributes {dimension_semantics = [#tpu.dimension_semantics<arbitrary>], iteration_bounds = array<i64: 1>, scalar_prefetch = 0 : i64, scratch_operands = 0 : i64, tpu.core_type = #tpu.core_type<tc>, window_params = [{transform_indices = @transform_0, window_bounds = array<i64: 64, 8>}, {transform_indices = @transform_1, window_bounds = array<i64: 64, 1>}, {pipeline_mode = #tpu.pipeline_mode<synchronous>, transform_indices = @transform_2, window_bounds = array<i64: 3, 16>}]} {
    %c0_i32 = arith.constant 0 : i32
    %0 = arith.cmpi eq, %arg0, %c0_i32 : i32
    %1 = arith.extui %0 : i1 to i32
    %c0_i32_0 = arith.constant 0 : i32
    %2 = arith.cmpi ne, %1, %c0_i32_0 : i32
    scf.if %2 {
      %cst_32 = arith.constant 0.000000e+00 : f32
      %113 = vector.broadcast %cst_32 : f32 to vector<3x16xf32>
      %c0_33 = arith.constant 0 : index
      %c0_34 = arith.constant 0 : index
      %114 = vector.load %arg3[%c0_33, %c0_34] : memref<3x16xf32, #tpu.memory_space<vmem>>, vector<3x16xf32>
      tpu.vector_store %arg3[%c0_33, %c0_34], %113 {strides = array<i32>} : memref<3x16xf32, #tpu.memory_space<vmem>>, vector<3x16xf32>,
    } else {
    }
    %c0 = arith.constant 0 : index
    %c0_1 = arith.constant 0 : index
    %3 = vector.load %arg1[%c0, %c0_1] : memref<64x8xf32, #tpu.memory_space<vmem>>, vector<64x8xf32>
    %c0_2 = arith.constant 0 : index
    %c0_3 = arith.constant 0 : index
    %4 = vector.load %arg2[%c0_2, %c0_3] : memref<64x1xi32, #tpu.memory_space<vmem>>, vector<64x1xi32>
    %cst = arith.constant dense<0xFF800000> : vector<64xf32>
    %5 = vector.multi_reduction <maximumf>, %3, %cst [1] : vector<64x8xf32> to vector<64xf32>
    %6 = vector.shape_cast %5 : vector<64xf32> to vector<64x1xf32>
    %7 = vector.broadcast %6 : vector<64x1xf32> to vector<64x8xf32>
    %8 = arith.subf %3, %7 : vector<64x8xf32>
    %9 = math.exp %8 : vector<64x8xf32>
    %cst_4 = arith.constant dense<0.000000e+00> : vector<64xf32>
    %10 = vector.multi_reduction <add>, %9, %cst_4 [1] : vector<64x8xf32> to vector<64xf32>
    %11 = vector.shape_cast %10 : vector<64xf32> to vector<64x1xf32>
    %12 = tpu.reciprocal %11 : vector<64x1xf32> -> vector<64x1xf32>
    %13 = tpu.iota {dimensions = array<i32: 1>} : vector<64x8xi32>
    %14 = arith.sitofp %13 : vector<64x8xi32> to vector<64x8xf32>
    %15 = vector.broadcast %6 : vector<64x1xf32> to vector<64x8xf32>
    %16 = arith.cmpf oeq, %3, %15 : vector<64x8xf32>
    %cst_5 = arith.constant 8.000000e+00 : f32
    %17 = vector.broadcast %cst_5 : f32 to vector<64x8xf32>
    %18 = arith.select %16, %14, %17 : vector<64x8xi1>, vector<64x8xf32>
    %cst_6 = arith.constant dense<0x7F800000> : vector<64xf32>
    %19 = vector.multi_reduction <minimumf>, %18, %cst_6 [1] : vector<64x8xf32> to vector<64xf32>
    %20 = vector.shape_cast %19 : vector<64xf32> to vector<64x1xf32>
    %21 = arith.sitofp %4 : vector<64x1xi32> to vector<64x1xf32>
    %22 = arith.cmpf oeq, %20, %21 : vector<64x1xf32>
    %23 = arith.extui %22 : vector<64x1xi1> to vector<64x1xi32>
    %24 = arith.sitofp %23 : vector<64x1xi32> to vector<64x1xf32>
    %c0_i32_7 = arith.constant 0 : i32
    %25 = vector.broadcast %c0_i32_7 : i32 to vector<64x1xi32>
    %cst_8 = arith.constant 0.0666666701 : f32
    %26 = vector.broadcast %cst_8 : f32 to vector<64x1xf32>
    %27 = arith.cmpf ogt, %12, %26 : vector<64x1xf32>
    %28 = arith.extui %27 : vector<64x1xi1> to vector<64x1xi32>
    %29 = arith.addi %25, %28 : vector<64x1xi32>
    %cst_9 = arith.constant 0.13333334 : f32
    %30 = vector.broadcast %cst_9 : f32 to vector<64x1xf32>
    %31 = arith.cmpf ogt, %12, %30 : vector<64x1xf32>
    %32 = arith.extui %31 : vector<64x1xi1> to vector<64x1xi32>
    %33 = arith.addi %29, %32 : vector<64x1xi32>
    %cst_10 = arith.constant 2.000000e-01 : f32
    %34 = vector.broadcast %cst_10 : f32 to vector<64x1xf32>
    %35 = arith.cmpf ogt, %12, %34 : vector<64x1xf32>
    %36 = arith.extui %35 : vector<64x1xi1> to vector<64x1xi32>
    %37 = arith.addi %33, %36 : vector<64x1xi32>
    %cst_11 = arith.constant 0.266666681 : f32
    %38 = vector.broadcast %cst_11 : f32 to vector<64x1xf32>
    %39 = arith.cmpf ogt, %12, %38 : vector<64x1xf32>
    %40 = arith.extui %39 : vector<64x1xi1> to vector<64x1xi32>
    %41 = arith.addi %37, %40 : vector<64x1xi32>
    %cst_12 = arith.constant 0.333333343 : f32
    %42 = vector.broadcast %cst_12 : f32 to vector<64x1xf32>
    %43 = arith.cmpf ogt, %12, %42 : vector<64x1xf32>
    %44 = arith.extui %43 : vector<64x1xi1> to vector<64x1xi32>
    %45 = arith.addi %41, %44 : vector<64x1xi32>
    %cst_13 = arith.constant 4.000000e-01 : f32
    %46 = vector.broadcast %cst_13 : f32 to vector<64x1xf32>
    %47 = arith.cmpf ogt, %12, %46 : vector<64x1xf32>
    %48 = arith.extui %47 : vector<64x1xi1> to vector<64x1xi32>
    %49 = arith.addi %45, %48 : vector<64x1xi32>
    %cst_14 = arith.constant 0.466666669 : f32
    %50 = vector.broadcast %cst_14 : f32 to vector<64x1xf32>
    %51 = arith.cmpf ogt, %12, %50 : vector<64x1xf32>
    %52 = arith.extui %51 : vector<64x1xi1> to vector<64x1xi32>
    %53 = arith.addi %49, %52 : vector<64x1xi32>
    %cst_15 = arith.constant 0.533333361 : f32
    %54 = vector.broadcast %cst_15 : f32 to vector<64x1xf32>
    %55 = arith.cmpf ogt, %12, %54 : vector<64x1xf32>
    %56 = arith.extui %55 : vector<64x1xi1> to vector<64x1xi32>
    %57 = arith.addi %53, %56 : vector<64x1xi32>
    %cst_16 = arith.constant 6.000000e-01 : f32
    %58 = vector.broadcast %cst_16 : f32 to vector<64x1xf32>
    %59 = arith.cmpf ogt, %12, %58 : vector<64x1xf32>
    %60 = arith.extui %59 : vector<64x1xi1> to vector<64x1xi32>
    %61 = arith.addi %57, %60 : vector<64x1xi32>
    %cst_17 = arith.constant 0.666666686 : f32
    %62 = vector.broadcast %cst_17 : f32 to vector<64x1xf32>
    %63 = arith.cmpf ogt, %12, %62 : vector<64x1xf32>
    %64 = arith.extui %63 : vector<64x1xi1> to vector<64x1xi32>
    %65 = arith.addi %61, %64 : vector<64x1xi32>
    %cst_18 = arith.constant 0.733333349 : f32
    %66 = vector.broadcast %cst_18 : f32 to vector<64x1xf32>
    %67 = arith.cmpf ogt, %12, %66 : vector<64x1xf32>
    %68 = arith.extui %67 : vector<64x1xi1> to vector<64x1xi32>
    %69 = arith.addi %65, %68 : vector<64x1xi32>
    %cst_19 = arith.constant 8.000000e-01 : f32
    %70 = vector.broadcast %cst_19 : f32 to vector<64x1xf32>
    %71 = arith.cmpf ogt, %12, %70 : vector<64x1xf32>
    %72 = arith.extui %71 : vector<64x1xi1> to vector<64x1xi32>
    %73 = arith.addi %69, %72 : vector<64x1xi32>
    %cst_20 = arith.constant 0.866666674 : f32
    %74 = vector.broadcast %cst_20 : f32 to vector<64x1xf32>
    %75 = arith.cmpf ogt, %12, %74 : vector<64x1xf32>
    %76 = arith.extui %75 : vector<64x1xi1> to vector<64x1xi32>
    %77 = arith.addi %73, %76 : vector<64x1xi32>
    %cst_21 = arith.constant 0.933333337 : f32
    %78 = vector.broadcast %cst_21 : f32 to vector<64x1xf32>
    %79 = arith.cmpf ogt, %12, %78 : vector<64x1xf32>
    %80 = arith.extui %79 : vector<64x1xi1> to vector<64x1xi32>
    %81 = arith.addi %77, %80 : vector<64x1xi32>
    %82 = tpu.iota {dimensions = array<i32: 0>} : vector<64x1xi32>
    %c64_i32 = arith.constant 64 : i32
    %83 = arith.muli %arg0, %c64_i32 : i32
    %84 = vector.broadcast %83 : i32 to vector<64x1xi32>
    %85 = arith.addi %84, %82 : vector<64x1xi32>
    %c64_i32_22 = arith.constant 64 : i32
    %86 = vector.broadcast %c64_i32_22 : i32 to vector<64x1xi32>
    %87 = arith.cmpi slt, %85, %86 : vector<64x1xi32>
    %cst_23 = arith.constant 0.000000e+00 : f32
    %88 = vector.broadcast %cst_23 : f32 to vector<64x1xf32>
    %89 = arith.select %87, %12, %88 : vector<64x1xi1>, vector<64x1xf32>
    %cst_24 = arith.constant 0.000000e+00 : f32
    %90 = vector.broadcast %cst_24 : f32 to vector<64x1xf32>
    %91 = arith.select %87, %24, %90 : vector<64x1xi1>, vector<64x1xf32>
    %c16_i32 = arith.constant 16 : i32
    %92 = vector.broadcast %c16_i32 : i32 to vector<64x1xi32>
    %93 = arith.select %87, %81, %92 : vector<64x1xi1>, vector<64x1xi32>
    %94 = tpu.iota {dimensions = array<i32: 1>} : vector<64x16xi32>
    %95 = vector.broadcast %93 : vector<64x1xi32> to vector<64x16xi32>
    %96 = arith.cmpi eq, %94, %95 : vector<64x16xi32>
    %97 = arith.extui %96 : vector<64x16xi1> to vector<64x16xi32>
    %98 = arith.sitofp %97 : vector<64x16xi32> to vector<64x16xf32>
    %cst_25 = arith.constant dense<0.000000e+00> : vector<16xf32>
    %99 = vector.multi_reduction <add>, %98, %cst_25 [0] : vector<64x16xf32> to vector<16xf32>
    %100 = vector.shape_cast %99 : vector<16xf32> to vector<1x16xf32>
    %101 = vector.broadcast %89 : vector<64x1xf32> to vector<64x16xf32>
    %102 = arith.mulf %98, %101 : vector<64x16xf32>
    %cst_26 = arith.constant dense<0.000000e+00> : vector<16xf32>
    %103 = vector.multi_reduction <add>, %102, %cst_26 [0] : vector<64x16xf32> to vector<16xf32>
    %104 = vector.shape_cast %103 : vector<16xf32> to vector<1x16xf32>
    %105 = vector.broadcast %91 : vector<64x1xf32> to vector<64x16xf32>
    %106 = arith.mulf %98, %105 : vector<64x16xf32>
    %cst_27 = arith.constant dense<0.000000e+00> : vector<16xf32>
    %107 = vector.multi_reduction <add>, %106, %cst_27 [0] : vector<64x16xf32> to vector<16xf32>
    %108 = vector.shape_cast %107 : vector<16xf32> to vector<1x16xf32>
    %109 = tpu.concatenate %100, %104, %108 in 0 : vector<1x16xf32>, vector<1x16xf32>, vector<1x16xf32> -> vector<3x16xf32>
    %c0_28 = arith.constant 0 : index
    %c0_29 = arith.constant 0 : index
    %110 = vector.load %arg3[%c0_28, %c0_29] : memref<3x16xf32, #tpu.memory_space<vmem>>, vector<3x16xf32>
    %111 = arith.addf %110, %109 : vector<3x16xf32>
    %c0_30 = arith.constant 0 : index
    %c0_31 = arith.constant 0 : index
    %112 = vector.load %arg3[%c0_30, %c0_31] : memref<3x16xf32, #tpu.memory_space<vmem>>, vector<3x16xf32>
    tpu.vector_store %arg3[%c0_30, %c0_31], %111 {strides = array<i32>} : memref<3x16xf32, #tpu.memory_space<vmem>>, vector<3x16xf32>,
    return
  }
  func.func @transform_0(%arg0: i32) -> (i32, i32) {
    %c0_i32 = arith.constant 0 : i32
    %c0_i32_0 = arith.constant 0 : i32
    return %arg0, %c0_i32 : i32, i32
  }
  func.func @transform_1(%arg0: i32) -> (i32, i32) {
    %c0_i32 = arith.constant 0 : i32
    %c0_i32_0 = arith.constant 0 : i32
    return %arg0, %c0_i32 : i32, i32
  }
  func.func @transform_2(%arg0: i32) -> (i32, i32) {
    %c0_i32 = arith.constant 0 : i32
    %c0_i32_0 = arith.constant 0 : i32
    %c0_i32_1 = arith.constant 0 : i32
    return %c0_i32, %c0_i32_0 : i32, i32
  }
}

</mosaic_0001>

<llo_original>
// kernel: tpu_custom_call.1
$region0: #{tpu_custom_call.1}
  #allocation0 [shape = 'u32[]', space=smem, size = 0x4, offset = 0x4, fixed_abs, tag = 'smem constant byte address 0x4 - core index']
  #allocation1 [shape = 'u32[144,128]{1,0:T(1,128)}', space=vmem, size = 0x12000, scoped, tag = 'internal scratch']
  %s0 = inlined_call_operand.vmem [shape: f32[64,8], index: 0, kind: input, shape index: {}]
  %s1 = inlined_call_operand.vmem [shape: s32[64,1], index: 1, kind: input, shape index: {}]
  %s2 = inlined_call_operand.hbm [shape: f32[3,16], index: 2, kind: output, shape index: {}]
  %s3 = sld [smem:[#allocation0]]
  $region22: #{tpu_custom_call.1} parent=0
    _
  %s5 = ssub.s32 1, %s3
  %s6 = scalar_select 0, %s5, %s3
  $region1: #{tpu_custom_call.1} parent=0
    #allocation2 [shape = 'u8[2048]{0}', space=vmem, size = 0x800, scoped, tag = 'output window, operand 0, single buffered']
    #allocation3 [shape = 's32[1]{0}', space=sflag, size = 0x4, scoped, tag = 'scoped memory for tpu_custom_call.1']
    %7 = vsyncpa [#allocation3], 0
    // Predicated region
    $region2: #{tpu_custom_call.1} parent=1 // pred_check
      _
    $region3: #{tpu_custom_call.1} parent=1 // pred_check_branch
      %9 = sbr.rel (0) target = $region5
    $region4: #{tpu_custom_call.1} parent=1 // pred_region
      _
    $region5: #{tpu_custom_call.1} parent=1 // pred_fallthru
      _
    // Predicated region
    $region6: #{tpu_custom_call.1} parent=1 // pred_check
      _
    $region7: #{tpu_custom_call.1} parent=1 // pred_check_branch
      %11 = sbr.rel (0) target = $region9
    $region8: #{tpu_custom_call.1} parent=1 // pred_region
      _
    $region9: #{tpu_custom_call.1} parent=1 // pred_fallthru
      _
    %p12 = scmp.eq.s32.totalorder 0, 0
    // Predicated region
    $region10: #{tpu_custom_call.1} parent=1 // pred_check
      %p13 = pneg %p12
    $region11: #{tpu_custom_call.1} parent=1 // pred_check_branch
      %15 = sbr.rel (%p13) target = $region13
    $region12: #{tpu_custom_call.1} parent=1 // pred_region
      %vm16 = vcmask 124928
      %17 = vst.msk [vmem:[#allocation2] sm:$0x7] %vm16, 0.0
    $region13: #{tpu_custom_call.1} parent=1 // pred_fallthru
      _
    %v18 = vld [vmem:[%s0] sm:$0xff]
    %v19 = vld [vmem:[%s0 + $0x8] sm:$0xff]
    %v20 = vld [vmem:[%s0 + $0x10] sm:$0xff]
    %v21 = vld [vmem:[%s0 + $0x18] sm:$0xff]
    %v22 = vld [vmem:[%s0 + $0x20] sm:$0xff]
    %v23 = vld [vmem:[%s0 + $0x28] sm:$0xff]
    %v24 = vld [vmem:[%s0 + $0x30] sm:$0xff]
    %v25 = vld [vmem:[%s0 + $0x38] sm:$0xff]
    %v26 = vld [vmem:[%s1] sm:$0xff]
    %v27 = vld [vmem:[%s1 + $0x8] sm:$0xff]
    %v28 = vld [vmem:[%s1 + $0x10] sm:$0xff]
    %v29 = vld [vmem:[%s1 + $0x18] sm:$0xff]
    %v30 = vld [vmem:[%s1 + $0x20] sm:$0xff]
    %v31 = vld [vmem:[%s1 + $0x28] sm:$0xff]
    %v32 = vld [vmem:[%s1 + $0x30] sm:$0xff]
    %v33 = vld [vmem:[%s1 + $0x38] sm:$0xff]
    %vm34 = vcmask 64512
    %v35 = vsel %vm34, %v18, -inf
    %36 = vmax.xlane.f32.xlu0 %v35
    %v37 = vpop.xlane.xlu0 %36
    %v38 = vsel %vm34, %v19, -inf
    %39 = vmax.xlane.f32.xlu0 %v38
    %v40 = vpop.xlane.xlu0 %39
    %v41 = vsel %vm34, %v20, -inf
    %42 = vmax.xlane.f32.xlu0 %v41
    %v43 = vpop.xlane.xlu0 %42
    %v44 = vsel %vm34, %v21, -inf
    %45 = vmax.xlane.f32.xlu0 %v44
    %v46 = vpop.xlane.xlu0 %45
    %v47 = vsel %vm34, %v22, -inf
    %48 = vmax.xlane.f32.xlu0 %v47
    %v49 = vpop.xlane.xlu0 %48
    %v50 = vsel %vm34, %v23, -inf
    %51 = vmax.xlane.f32.xlu0 %v50
    %v52 = vpop.xlane.xlu0 %51
    %v53 = vsel %vm34, %v24, -inf
    %54 = vmax.xlane.f32.xlu0 %v53
    %v55 = vpop.xlane.xlu0 %54
    %v56 = vsel %vm34, %v25, -inf
    %57 = vmax.xlane.f32.xlu0 %v56
    %v58 = vpop.xlane.xlu0 %57
    %v59 = vsub.f32 %v18, %v37
    %v60 = vsub.f32 %v19, %v40
    %v61 = vsub.f32 %v20, %v43
    %v62 = vsub.f32 %v21, %v46
    %v63 = vsub.f32 %v22, %v49
    %v64 = vsub.f32 %v23, %v52
    %v65 = vsub.f32 %v24, %v55
    %v66 = vsub.f32 %v25, %v58
    %v67 = vmul.f32 %v59, 1.442695
    %v68 = vpow.pop %v67
    %v69 = vmul.f32 %v60, 1.442695
    %v70 = vpow.pop %v69
    %v71 = vmul.f32 %v61, 1.442695
    %v72 = vpow.pop %v71
    %v73 = vmul.f32 %v62, 1.442695
    %v74 = vpow.pop %v73
    %v75 = vmul.f32 %v63, 1.442695
    %v76 = vpow.pop %v75
    %v77 = vmul.f32 %v64, 1.442695
    %v78 = vpow.pop %v77
    %v79 = vmul.f32 %v65, 1.442695
    %v80 = vpow.pop %v79
    %v81 = vmul.f32 %v66, 1.442695
    %v82 = vpow.pop %v81
    %v83 = vsel %vm34, %v68, 0.0
    %84 = vadd.xlane.f32.xlu0 %v83
    %v85 = vpop.xlane.xlu0 %84
    %v86 = vsel %vm34, %v70, 0.0
    %87 = vadd.xlane.f32.xlu0 %v86
    %v88 = vpop.xlane.xlu0 %87
    %v89 = vsel %vm34, %v72, 0.0
    %90 = vadd.xlane.f32.xlu0 %v89
    %v91 = vpop.xlane.xlu0 %90
    %v92 = vsel %vm34, %v74, 0.0
    %93 = vadd.xlane.f32.xlu0 %v92
    %v94 = vpop.xlane.xlu0 %93
    %v95 = vsel %vm34, %v76, 0.0
    %96 = vadd.xlane.f32.xlu0 %v95
    %v97 = vpop.xlane.xlu0 %96
    %v98 = vsel %vm34, %v78, 0.0
    %99 = vadd.xlane.f32.xlu0 %v98
    %v100 = vpop.xlane.xlu0 %99
    %v101 = vsel %vm34, %v80, 0.0
    %102 = vadd.xlane.f32.xlu0 %v101
    %v103 = vpop.xlane.xlu0 %102
    %v104 = vsel %vm34, %v82, 0.0
    %105 = vadd.xlane.f32.xlu0 %v104
    %v106 = vpop.xlane.xlu0 %105
    %v107 = vrcp.pop %v85
    %v108 = vrcp.pop %v88
    %v109 = vrcp.pop %v91
    %v110 = vrcp.pop %v94
    %v111 = vrcp.pop %v97
    %v112 = vrcp.pop %v100
    %v113 = vrcp.pop %v103
    %v114 = vrcp.pop %v106
    %v115 = vlaneseq
    %v116 = vand.u32 %v115, 127
    %v117 = vcvt.s32.f32 %v116
    %vm118 = vcmp.eq.f32.partialorder %v18, %v37
    %vm119 = vcmp.eq.f32.partialorder %v19, %v40
    %vm120 = vcmp.eq.f32.partialorder %v20, %v43
    %vm121 = vcmp.eq.f32.partialorder %v21, %v46
    %vm122 = vcmp.eq.f32.partialorder %v22, %v49
    %vm123 = vcmp.eq.f32.partialorder %v23, %v52
    %vm124 = vcmp.eq.f32.partialorder %v24, %v55
    %vm125 = vcmp.eq.f32.partialorder %v25, %v58
    %v126 = vsel %vm118, %v117, 8.0
    %v127 = vsel %vm119, %v117, 8.0
    %v128 = vsel %vm120, %v117, 8.0
    %v129 = vsel %vm121, %v117, 8.0
    %v130 = vsel %vm122, %v117, 8.0
    %v131 = vsel %vm123, %v117, 8.0
    %v132 = vsel %vm124, %v117, 8.0
    %v133 = vsel %vm125, %v117, 8.0
    %v134 = vsel %vm34, %v126, inf
    %135 = vmin.xlane.f32.xlu0 %v134
    %v136 = vpop.xlane.xlu0 %135
    %v137 = vsel %vm34, %v127, inf
    %138 = vmin.xlane.f32.xlu0 %v137
    %v139 = vpop.xlane.xlu0 %138
    %v140 = vsel %vm34, %v128, inf
    %141 = vmin.xlane.f32.xlu0 %v140
    %v142 = vpop.xlane.xlu0 %141
    %v143 = vsel %vm34, %v129, inf
    %144 = vmin.xlane.f32.xlu0 %v143
    %v145 = vpop.xlane.xlu0 %144
    %v146 = vsel %vm34, %v130, inf
    %147 = vmin.xlane.f32.xlu0 %v146
    %v148 = vpop.xlane.xlu0 %147
    %v149 = vsel %vm34, %v131, inf
    %150 = vmin.xlane.f32.xlu0 %v149
    %v151 = vpop.xlane.xlu0 %150
    %v152 = vsel %vm34, %v132, inf
    %153 = vmin.xlane.f32.xlu0 %v152
    %v154 = vpop.xlane.xlu0 %153
    %v155 = vsel %vm34, %v133, inf
    %156 = vmin.xlane.f32.xlu0 %v155
    %v157 = vpop.xlane.xlu0 %156
    %v158 = vcvt.s32.f32 %v26
    %v159 = vcvt.s32.f32 %v27
    %v160 = vcvt.s32.f32 %v28
    %v161 = vcvt.s32.f32 %v29
    %v162 = vcvt.s32.f32 %v30
    %v163 = vcvt.s32.f32 %v31
    %v164 = vcvt.s32.f32 %v32
    %v165 = vcvt.s32.f32 %v33
    %vm166 = vcmp.eq.f32.partialorder %v136, %v158
    %vm167 = vcmp.eq.f32.partialorder %v139, %v159
    %vm168 = vcmp.eq.f32.partialorder %v142, %v160
    %vm169 = vcmp.eq.f32.partialorder %v145, %v161
    %vm170 = vcmp.eq.f32.partialorder %v148, %v162
    %vm171 = vcmp.eq.f32.partialorder %v151, %v163
    %vm172 = vcmp.eq.f32.partialorder %v154, %v164
    %vm173 = vcmp.eq.f32.partialorder %v157, %v165
    %v174 = vsel %vm166, 1, 0
    %v175 = vsel %vm167, 1, 0
    %v176 = vsel %vm168, 1, 0
    %v177 = vsel %vm169, 1, 0
    %v178 = vsel %vm170, 1, 0
    %v179 = vsel %vm171, 1, 0
    %v180 = vsel %vm172, 1, 0
    %v181 = vsel %vm173, 1, 0
    %v182 = vcvt.s32.f32 %v174
    %v183 = vcvt.s32.f32 %v175
    %v184 = vcvt.s32.f32 %v176
    %v185 = vcvt.s32.f32 %v177
    %v186 = vcvt.s32.f32 %v178
    %v187 = vcvt.s32.f32 %v179
    %v188 = vcvt.s32.f32 %v180
    %v189 = vcvt.s32.f32 %v181
    %vm190 = vcmp.gt.f32.partialorder %v107, 0.06666667
    %vm191 = vcmp.gt.f32.partialorder %v108, 0.06666667
    %vm192 = vcmp.gt.f32.partialorder %v109, 0.06666667
    %vm193 = vcmp.gt.f32.partialorder %v110, 0.06666667
    %vm194 = vcmp.gt.f32.partialorder %v111, 0.06666667
    %vm195 = vcmp.gt.f32.partialorder %v112, 0.06666667
    %vm196 = vcmp.gt.f32.partialorder %v113, 0.06666667
    %vm197 = vcmp.gt.f32.partialorder %v114, 0.06666667
    %v198 = vsel %vm190, 1, 0
    %v199 = vsel %vm191, 1, 0
    %v200 = vsel %vm192, 1, 0
    %v201 = vsel %vm193, 1, 0
    %v202 = vsel %vm194, 1, 0
    %v203 = vsel %vm195, 1, 0
    %v204 = vsel %vm196, 1, 0
    %v205 = vsel %vm197, 1, 0
    %vm206 = vcmp.gt.f32.partialorder %v107, 0.13333334
    %vm207 = vcmp.gt.f32.partialorder %v108, 0.13333334
    %vm208 = vcmp.gt.f32.partialorder %v109, 0.13333334
    %vm209 = vcmp.gt.f32.partialorder %v110, 0.13333334
    %vm210 = vcmp.gt.f32.partialorder %v111, 0.13333334
    %vm211 = vcmp.gt.f32.partialorder %v112, 0.13333334
    %vm212 = vcmp.gt.f32.partialorder %v113, 0.13333334
    %vm213 = vcmp.gt.f32.partialorder %v114, 0.13333334
    %v214 = vsel %vm206, 1, 0
    %v215 = vsel %vm207, 1, 0
    %v216 = vsel %vm208, 1, 0
    %v217 = vsel %vm209, 1, 0
    %v218 = vsel %vm210, 1, 0
    %v219 = vsel %vm211, 1, 0
    %v220 = vsel %vm212, 1, 0
    %v221 = vsel %vm213, 1, 0
    %v222 = vadd.s32 %v198, %v214
    %v223 = vadd.s32 %v199, %v215
    %v224 = vadd.s32 %v200, %v216
    %v225 = vadd.s32 %v201, %v217
    %v226 = vadd.s32 %v202, %v218
    %v227 = vadd.s32 %v203, %v219
    %v228 = vadd.s32 %v204, %v220
    %v229 = vadd.s32 %v205, %v221
    %vm230 = vcmp.gt.f32.partialorder %v107, 0.2
    %vm231 = vcmp.gt.f32.partialorder %v108, 0.2
    %vm232 = vcmp.gt.f32.partialorder %v109, 0.2
    %vm233 = vcmp.gt.f32.partialorder %v110, 0.2
    %vm234 = vcmp.gt.f32.partialorder %v111, 0.2
    %vm235 = vcmp.gt.f32.partialorder %v112, 0.2
    %vm236 = vcmp.gt.f32.partialorder %v113, 0.2
    %vm237 = vcmp.gt.f32.partialorder %v114, 0.2
    %v238 = vsel %vm230, 1, 0
    %v239 = vsel %vm231, 1, 0
    %v240 = vsel %vm232, 1, 0
    %v241 = vsel %vm233, 1, 0
    %v242 = vsel %vm234, 1, 0
    %v243 = vsel %vm235, 1, 0
    %v244 = vsel %vm236, 1, 0
    %v245 = vsel %vm237, 1, 0
    %v246 = vadd.s32 %v222, %v238
    %v247 = vadd.s32 %v223, %v239
    %v248 = vadd.s32 %v224, %v240
    %v249 = vadd.s32 %v225, %v241
    %v250 = vadd.s32 %v226, %v242
    %v251 = vadd.s32 %v227, %v243
    %v252 = vadd.s32 %v228, %v244
    %v253 = vadd.s32 %v229, %v245
    %vm254 = vcmp.gt.f32.partialorder %v107, 0.26666668
    %vm255 = vcmp.gt.f32.partialorder %v108, 0.26666668
    %vm256 = vcmp.gt.f32.partialorder %v109, 0.26666668
    %vm257 = vcmp.gt.f32.partialorder %v110, 0.26666668
    %vm258 = vcmp.gt.f32.partialorder %v111, 0.26666668
    %vm259 = vcmp.gt.f32.partialorder %v112, 0.26666668
    %vm260 = vcmp.gt.f32.partialorder %v113, 0.26666668
    %vm261 = vcmp.gt.f32.partialorder %v114, 0.26666668
    %v262 = vsel %vm254, 1, 0
    %v263 = vsel %vm255, 1, 0
    %v264 = vsel %vm256, 1, 0
    %v265 = vsel %vm257, 1, 0
    %v266 = vsel %vm258, 1, 0
    %v267 = vsel %vm259, 1, 0
    %v268 = vsel %vm260, 1, 0
    %v269 = vsel %vm261, 1, 0
    %v270 = vadd.s32 %v246, %v262
    %v271 = vadd.s32 %v247, %v263
    %v272 = vadd.s32 %v248, %v264
    %v273 = vadd.s32 %v249, %v265
    %v274 = vadd.s32 %v250, %v266
    %v275 = vadd.s32 %v251, %v267
    %v276 = vadd.s32 %v252, %v268
    %v277 = vadd.s32 %v253, %v269
    %vm278 = vcmp.gt.f32.partialorder %v107, 0.33333334
    %vm279 = vcmp.gt.f32.partialorder %v108, 0.33333334
    %vm280 = vcmp.gt.f32.partialorder %v109, 0.33333334
    %vm281 = vcmp.gt.f32.partialorder %v110, 0.33333334
    %vm282 = vcmp.gt.f32.partialorder %v111, 0.33333334
    %vm283 = vcmp.gt.f32.partialorder %v112, 0.33333334
    %vm284 = vcmp.gt.f32.partialorder %v113, 0.33333334
    %vm285 = vcmp.gt.f32.partialorder %v114, 0.33333334
    %v286 = vsel %vm278, 1, 0
    %v287 = vsel %vm279, 1, 0
    %v288 = vsel %vm280, 1, 0
    %v289 = vsel %vm281, 1, 0
    %v290 = vsel %vm282, 1, 0
    %v291 = vsel %vm283, 1, 0
    %v292 = vsel %vm284, 1, 0
    %v293 = vsel %vm285, 1, 0
    %v294 = vadd.s32 %v270, %v286
    %v295 = vadd.s32 %v271, %v287
    %v296 = vadd.s32 %v272, %v288
    %v297 = vadd.s32 %v273, %v289
    %v298 = vadd.s32 %v274, %v290
    %v299 = vadd.s32 %v275, %v291
    %v300 = vadd.s32 %v276, %v292
    %v301 = vadd.s32 %v277, %v293
    %vm302 = vcmp.gt.f32.partialorder %v107, 0.4
    %vm303 = vcmp.gt.f32.partialorder %v108, 0.4
    %vm304 = vcmp.gt.f32.partialorder %v109, 0.4
    %vm305 = vcmp.gt.f32.partialorder %v110, 0.4
    %vm306 = vcmp.gt.f32.partialorder %v111, 0.4
    %vm307 = vcmp.gt.f32.partialorder %v112, 0.4
    %vm308 = vcmp.gt.f32.partialorder %v113, 0.4
    %vm309 = vcmp.gt.f32.partialorder %v114, 0.4
    %v310 = vsel %vm302, 1, 0
    %v311 = vsel %vm303, 1, 0
    %v312 = vsel %vm304, 1, 0
    %v313 = vsel %vm305, 1, 0
    %v314 = vsel %vm306, 1, 0
    %v315 = vsel %vm307, 1, 0
    %v316 = vsel %vm308, 1, 0
    %v317 = vsel %vm309, 1, 0
    %v318 = vadd.s32 %v294, %v310
    %v319 = vadd.s32 %v295, %v311
    %v320 = vadd.s32 %v296, %v312
    %v321 = vadd.s32 %v297, %v313
    %v322 = vadd.s32 %v298, %v314
    %v323 = vadd.s32 %v299, %v315
    %v324 = vadd.s32 %v300, %v316
    %v325 = vadd.s32 %v301, %v317
    %vm326 = vcmp.gt.f32.partialorder %v107, 0.46666667
    %vm327 = vcmp.gt.f32.partialorder %v108, 0.46666667
    %vm328 = vcmp.gt.f32.partialorder %v109, 0.46666667
    %vm329 = vcmp.gt.f32.partialorder %v110, 0.46666667
    %vm330 = vcmp.gt.f32.partialorder %v111, 0.46666667
    %vm331 = vcmp.gt.f32.partialorder %v112, 0.46666667
    %vm332 = vcmp.gt.f32.partialorder %v113, 0.46666667
    %vm333 = vcmp.gt.f32.partialorder %v114, 0.46666667
    %v334 = vsel %vm326, 1, 0
    %v335 = vsel %vm327, 1, 0
    %v336 = vsel %vm328, 1, 0
    %v337 = vsel %vm329, 1, 0
    %v338 = vsel %vm330, 1, 0
    %v339 = vsel %vm331, 1, 0
    %v340 = vsel %vm332, 1, 0
    %v341 = vsel %vm333, 1, 0
    %v342 = vadd.s32 %v318, %v334
    %v343 = vadd.s32 %v319, %v335
    %v344 = vadd.s32 %v320, %v336
    %v345 = vadd.s32 %v321, %v337
    %v346 = vadd.s32 %v322, %v338
    %v347 = vadd.s32 %v323, %v339
    %v348 = vadd.s32 %v324, %v340
    %v349 = vadd.s32 %v325, %v341
    %vm350 = vcmp.gt.f32.partialorder %v107, 0.53333336
    %vm351 = vcmp.gt.f32.partialorder %v108, 0.53333336
    %vm352 = vcmp.gt.f32.partialorder %v109, 0.53333336
    %vm353 = vcmp.gt.f32.partialorder %v110, 0.53333336
    %vm354 = vcmp.gt.f32.partialorder %v111, 0.53333336
    %vm355 = vcmp.gt.f32.partialorder %v112, 0.53333336
    %vm356 = vcmp.gt.f32.partialorder %v113, 0.53333336
    %vm357 = vcmp.gt.f32.partialorder %v114, 0.53333336
    %v358 = vsel %vm350, 1, 0
    %v359 = vsel %vm351, 1, 0
    %v360 = vsel %vm352, 1, 0
    %v361 = vsel %vm353, 1, 0
    %v362 = vsel %vm354, 1, 0
    %v363 = vsel %vm355, 1, 0
    %v364 = vsel %vm356, 1, 0
    %v365 = vsel %vm357, 1, 0
    %v366 = vadd.s32 %v342, %v358
    %v367 = vadd.s32 %v343, %v359
    %v368 = vadd.s32 %v344, %v360
    %v369 = vadd.s32 %v345, %v361
    %v370 = vadd.s32 %v346, %v362
    %v371 = vadd.s32 %v347, %v363
    %v372 = vadd.s32 %v348, %v364
    %v373 = vadd.s32 %v349, %v365
    %vm374 = vcmp.gt.f32.partialorder %v107, 0.6
    %vm375 = vcmp.gt.f32.partialorder %v108, 0.6
    %vm376 = vcmp.gt.f32.partialorder %v109, 0.6
    %vm377 = vcmp.gt.f32.partialorder %v110, 0.6
    %vm378 = vcmp.gt.f32.partialorder %v111, 0.6
    %vm379 = vcmp.gt.f32.partialorder %v112, 0.6
    %vm380 = vcmp.gt.f32.partialorder %v113, 0.6
    %vm381 = vcmp.gt.f32.partialorder %v114, 0.6
    %v382 = vsel %vm374, 1, 0
    %v383 = vsel %vm375, 1, 0
    %v384 = vsel %vm376, 1, 0
    %v385 = vsel %vm377, 1, 0
    %v386 = vsel %vm378, 1, 0
    %v387 = vsel %vm379, 1, 0
    %v388 = vsel %vm380, 1, 0
    %v389 = vsel %vm381, 1, 0
    %v390 = vadd.s32 %v366, %v382
    %v391 = vadd.s32 %v367, %v383
    %v392 = vadd.s32 %v368, %v384
    %v393 = vadd.s32 %v369, %v385
    %v394 = vadd.s32 %v370, %v386
    %v395 = vadd.s32 %v371, %v387
    %v396 = vadd.s32 %v372, %v388
    %v397 = vadd.s32 %v373, %v389
    %vm398 = vcmp.gt.f32.partialorder %v107, 0.6666667
    %vm399 = vcmp.gt.f32.partialorder %v108, 0.6666667
    %vm400 = vcmp.gt.f32.partialorder %v109, 0.6666667
    %vm401 = vcmp.gt.f32.partialorder %v110, 0.6666667
    %vm402 = vcmp.gt.f32.partialorder %v111, 0.6666667
    %vm403 = vcmp.gt.f32.partialorder %v112, 0.6666667
    %vm404 = vcmp.gt.f32.partialorder %v113, 0.6666667
    %vm405 = vcmp.gt.f32.partialorder %v114, 0.6666667
    %v406 = vsel %vm398, 1, 0
    %v407 = vsel %vm399, 1, 0
    %v408 = vsel %vm400, 1, 0
    %v409 = vsel %vm401, 1, 0
    %v410 = vsel %vm402, 1, 0
    %v411 = vsel %vm403, 1, 0
    %v412 = vsel %vm404, 1, 0
    %v413 = vsel %vm405, 1, 0
    %v414 = vadd.s32 %v390, %v406
    %v415 = vadd.s32 %v391, %v407
    %v416 = vadd.s32 %v392, %v408
    %v417 = vadd.s32 %v393, %v409
    %v418 = vadd.s32 %v394, %v410
    %v419 = vadd.s32 %v395, %v411
    %v420 = vadd.s32 %v396, %v412
    %v421 = vadd.s32 %v397, %v413
    %vm422 = vcmp.gt.f32.partialorder %v107, 0.73333335
    %vm423 = vcmp.gt.f32.partialorder %v108, 0.73333335
    %vm424 = vcmp.gt.f32.partialorder %v109, 0.73333335
    %vm425 = vcmp.gt.f32.partialorder %v110, 0.73333335
    %vm426 = vcmp.gt.f32.partialorder %v111, 0.73333335
    %vm427 = vcmp.gt.f32.partialorder %v112, 0.73333335
    %vm428 = vcmp.gt.f32.partialorder %v113, 0.73333335
    %vm429 = vcmp.gt.f32.partialorder %v114, 0.73333335
    %v430 = vsel %vm422, 1, 0
    %v431 = vsel %vm423, 1, 0
    %v432 = vsel %vm424, 1, 0
    %v433 = vsel %vm425, 1, 0
    %v434 = vsel %vm426, 1, 0
    %v435 = vsel %vm427, 1, 0
    %v436 = vsel %vm428, 1, 0
    %v437 = vsel %vm429, 1, 0
    %v438 = vadd.s32 %v414, %v430
    %v439 = vadd.s32 %v415, %v431
    %v440 = vadd.s32 %v416, %v432
    %v441 = vadd.s32 %v417, %v433
    %v442 = vadd.s32 %v418, %v434
    %v443 = vadd.s32 %v419, %v435
    %v444 = vadd.s32 %v420, %v436
    %v445 = vadd.s32 %v421, %v437
    %vm446 = vcmp.gt.f32.partialorder %v107, 0.8
    %vm447 = vcmp.gt.f32.partialorder %v108, 0.8
    %vm448 = vcmp.gt.f32.partialorder %v109, 0.8
    %vm449 = vcmp.gt.f32.partialorder %v110, 0.8
    %vm450 = vcmp.gt.f32.partialorder %v111, 0.8
    %vm451 = vcmp.gt.f32.partialorder %v112, 0.8
    %vm452 = vcmp.gt.f32.partialorder %v113, 0.8
    %vm453 = vcmp.gt.f32.partialorder %v114, 0.8
    %v454 = vsel %vm446, 1, 0
    %v455 = vsel %vm447, 1, 0
    %v456 = vsel %vm448, 1, 0
    %v457 = vsel %vm449, 1, 0
    %v458 = vsel %vm450, 1, 0
    %v459 = vsel %vm451, 1, 0
    %v460 = vsel %vm452, 1, 0
    %v461 = vsel %vm453, 1, 0
    %v462 = vadd.s32 %v438, %v454
    %v463 = vadd.s32 %v439, %v455
    %v464 = vadd.s32 %v440, %v456
    %v465 = vadd.s32 %v441, %v457
    %v466 = vadd.s32 %v442, %v458
    %v467 = vadd.s32 %v443, %v459
    %v468 = vadd.s32 %v444, %v460
    %v469 = vadd.s32 %v445, %v461
    %vm470 = vcmp.gt.f32.partialorder %v107, 0.8666667
    %vm471 = vcmp.gt.f32.partialorder %v108, 0.8666667
    %vm472 = vcmp.gt.f32.partialorder %v109, 0.8666667
    %vm473 = vcmp.gt.f32.partialorder %v110, 0.8666667
    %vm474 = vcmp.gt.f32.partialorder %v111, 0.8666667
    %vm475 = vcmp.gt.f32.partialorder %v112, 0.8666667
    %vm476 = vcmp.gt.f32.partialorder %v113, 0.8666667
    %vm477 = vcmp.gt.f32.partialorder %v114, 0.8666667
    %v478 = vsel %vm470, 1, 0
    %v479 = vsel %vm471, 1, 0
    %v480 = vsel %vm472, 1, 0
    %v481 = vsel %vm473, 1, 0
    %v482 = vsel %vm474, 1, 0
    %v483 = vsel %vm475, 1, 0
    %v484 = vsel %vm476, 1, 0
    %v485 = vsel %vm477, 1, 0
    %v486 = vadd.s32 %v462, %v478
    %v487 = vadd.s32 %v463, %v479
    %v488 = vadd.s32 %v464, %v480
    %v489 = vadd.s32 %v465, %v481
    %v490 = vadd.s32 %v466, %v482
    %v491 = vadd.s32 %v467, %v483
    %v492 = vadd.s32 %v468, %v484
    %v493 = vadd.s32 %v469, %v485
    %vm494 = vcmp.gt.f32.partialorder %v107, 0.93333334
    %vm495 = vcmp.gt.f32.partialorder %v108, 0.93333334
    %vm496 = vcmp.gt.f32.partialorder %v109, 0.93333334
    %vm497 = vcmp.gt.f32.partialorder %v110, 0.93333334
    %vm498 = vcmp.gt.f32.partialorder %v111, 0.93333334
    %vm499 = vcmp.gt.f32.partialorder %v112, 0.93333334
    %vm500 = vcmp.gt.f32.partialorder %v113, 0.93333334
    %vm501 = vcmp.gt.f32.partialorder %v114, 0.93333334
    %v502 = vsel %vm494, 1, 0
    %v503 = vsel %vm495, 1, 0
    %v504 = vsel %vm496, 1, 0
    %v505 = vsel %vm497, 1, 0
    %v506 = vsel %vm498, 1, 0
    %v507 = vsel %vm499, 1, 0
    %v508 = vsel %vm500, 1, 0
    %v509 = vsel %vm501, 1, 0
    %v510 = vadd.s32 %v486, %v502
    %v511 = vadd.s32 %v487, %v503
    %v512 = vadd.s32 %v488, %v504
    %v513 = vadd.s32 %v489, %v505
    %v514 = vadd.s32 %v490, %v506
    %v515 = vadd.s32 %v491, %v507
    %v516 = vadd.s32 %v492, %v508
    %v517 = vadd.s32 %v493, %v509
    %v518 = vlaneseq
    %v519 = vshrl.u32 %v518, 7
    %v520 = vadd.s32 %v519, 8
    %v521 = vadd.s32 %v519, 16
    %v522 = vadd.s32 %v519, 24
    %v523 = vadd.s32 %v519, 32
    %v524 = vadd.s32 %v519, 40
    %v525 = vadd.s32 %v519, 48
    %v526 = vadd.s32 %v519, 56
    %s527 = smul.u32 0, 64
    %v528 = vstv %s527
    %v529 = vadd.s32 %v528, %v519
    %v530 = vadd.s32 %v528, %v520
    %v531 = vadd.s32 %v528, %v521
    %v532 = vadd.s32 %v528, %v522
    %v533 = vadd.s32 %v528, %v523
    %v534 = vadd.s32 %v528, %v524
    %v535 = vadd.s32 %v528, %v525
    %v536 = vadd.s32 %v528, %v526
    %vm537 = vcmp.lt.s32.totalorder %v529, 64
    %vm538 = vcmp.lt.s32.totalorder %v530, 64
    %vm539 = vcmp.lt.s32.totalorder %v531, 64
    %vm540 = vcmp.lt.s32.totalorder %v532, 64
    %vm541 = vcmp.lt.s32.totalorder %v533, 64
    %vm542 = vcmp.lt.s32.totalorder %v534, 64
    %vm543 = vcmp.lt.s32.totalorder %v535, 64
    %vm544 = vcmp.lt.s32.totalorder %v536, 64
    %v545 = vsel %vm537, %v107, 0.0
    %v546 = vsel %vm538, %v108, 0.0
    %v547 = vsel %vm539, %v109, 0.0
    %v548 = vsel %vm540, %v110, 0.0
    %v549 = vsel %vm541, %v111, 0.0
    %v550 = vsel %vm542, %v112, 0.0
    %v551 = vsel %vm543, %v113, 0.0
    %v552 = vsel %vm544, %v114, 0.0
    %v553 = vsel %vm537, %v182, 0.0
    %v554 = vsel %vm538, %v183, 0.0
    %v555 = vsel %vm539, %v184, 0.0
    %v556 = vsel %vm540, %v185, 0.0
    %v557 = vsel %vm541, %v186, 0.0
    %v558 = vsel %vm542, %v187, 0.0
    %v559 = vsel %vm543, %v188, 0.0
    %v560 = vsel %vm544, %v189, 0.0
    %v561 = vsel %vm537, %v510, 16
    %v562 = vsel %vm538, %v511, 16
    %v563 = vsel %vm539, %v512, 16
    %v564 = vsel %vm540, %v513, 16
    %v565 = vsel %vm541, %v514, 16
    %v566 = vsel %vm542, %v515, 16
    %v567 = vsel %vm543, %v516, 16
    %v568 = vsel %vm544, %v517, 16
    %vm569 = vcmp.eq.s32.totalorder %v116, %v561
    %vm570 = vcmp.eq.s32.totalorder %v116, %v562
    %vm571 = vcmp.eq.s32.totalorder %v116, %v563
    %vm572 = vcmp.eq.s32.totalorder %v116, %v564
    %vm573 = vcmp.eq.s32.totalorder %v116, %v565
    %vm574 = vcmp.eq.s32.totalorder %v116, %v566
    %vm575 = vcmp.eq.s32.totalorder %v116, %v567
    %vm576 = vcmp.eq.s32.totalorder %v116, %v568
    %v577 = vsel %vm569, 1, 0
    %v578 = vsel %vm570, 1, 0
    %v579 = vsel %vm571, 1, 0
    %v580 = vsel %vm572, 1, 0
    %v581 = vsel %vm573, 1, 0
    %v582 = vsel %vm574, 1, 0
    %v583 = vsel %vm575, 1, 0
    %v584 = vsel %vm576, 1, 0
    %v585 = vcvt.s32.f32 %v577
    %v586 = vcvt.s32.f32 %v578
    %v587 = vcvt.s32.f32 %v579
    %v588 = vcvt.s32.f32 %v580
    %v589 = vcvt.s32.f32 %v581
    %v590 = vcvt.s32.f32 %v582
    %v591 = vcvt.s32.f32 %v583
    %v592 = vcvt.s32.f32 %v584
    %vm593 = vcmask 130048
    %v594 = vsel %vm593, %v585, 0.0
    %v595 = vsel %vm593, %v586, 0.0
    %v596 = vadd.f32 %v594, %v595
    %v597 = vsel %vm593, %v587, 0.0
    %v598 = vadd.f32 %v596, %v597
    %v599 = vsel %vm593, %v588, 0.0
    %v600 = vadd.f32 %v598, %v599
    %v601 = vsel %vm593, %v589, 0.0
    %v602 = vadd.f32 %v600, %v601
    %v603 = vsel %vm593, %v590, 0.0
    %v604 = vadd.f32 %v602, %v603
    %v605 = vsel %vm593, %v591, 0.0
    %v606 = vadd.f32 %v604, %v605
    %v607 = vsel %vm593, %v592, 0.0
    %v608 = vadd.f32 %v606, %v607
    %v609 = vrot.slane %v608, 4
    %v610 = vadd.f32 %v608, %v609
    %v611 = vrot.slane %v610, 2
    %v612 = vadd.f32 %v610, %v611
    %v613 = vrot.slane %v612, 1
    %v614 = vadd.f32 %v612, %v613
    %v615 = vmul.f32 %v585, %v545
    %v616 = vmul.f32 %v586, %v546
    %v617 = vmul.f32 %v587, %v547
    %v618 = vmul.f32 %v588, %v548
    %v619 = vmul.f32 %v589, %v549
    %v620 = vmul.f32 %v590, %v550
    %v621 = vmul.f32 %v591, %v551
    %v622 = vmul.f32 %v592, %v552
    %v623 = vsel %vm593, %v615, 0.0
    %v624 = vsel %vm593, %v616, 0.0
    %v625 = vadd.f32 %v623, %v624
    %v626 = vsel %vm593, %v617, 0.0
    %v627 = vadd.f32 %v625, %v626
    %v628 = vsel %vm593, %v618, 0.0
    %v629 = vadd.f32 %v627, %v628
    %v630 = vsel %vm593, %v619, 0.0
    %v631 = vadd.f32 %v629, %v630
    %v632 = vsel %vm593, %v620, 0.0
    %v633 = vadd.f32 %v631, %v632
    %v634 = vsel %vm593, %v621, 0.0
    %v635 = vadd.f32 %v633, %v634
    %v636 = vsel %vm593, %v622, 0.0
    %v637 = vadd.f32 %v635, %v636
    %v638 = vrot.slane %v637, 4
    %v639 = vadd.f32 %v637, %v638
    %v640 = vrot.slane %v639, 2
    %v641 = vadd.f32 %v639, %v640
    %v642 = vrot.slane %v641, 1
    %v643 = vadd.f32 %v641, %v642
    %645 = vset.pattern.permute.xlu0 0
    %646 = vperm.xlu0 %645, %v553
    %v647 = vpop.permute.xlu0 %646
    %650 = vset.pattern.permute.xlu0 0
    %651 = vperm.xlu0 %650, %v554
    %v652 = vpop.permute.xlu0 %651
    %655 = vset.pattern.permute.xlu0 0
    %656 = vperm.xlu0 %655, %v555
    %v657 = vpop.permute.xlu0 %656
    %660 = vset.pattern.permute.xlu0 0
    %661 = vperm.xlu0 %660, %v556
    %v662 = vpop.permute.xlu0 %661
    %665 = vset.pattern.permute.xlu0 0
    %666 = vperm.xlu0 %665, %v557
    %v667 = vpop.permute.xlu0 %666
    %670 = vset.pattern.permute.xlu0 0
    %671 = vperm.xlu0 %670, %v558
    %v672 = vpop.permute.xlu0 %671
    %675 = vset.pattern.permute.xlu0 0
    %676 = vperm.xlu0 %675, %v559
    %v677 = vpop.permute.xlu0 %676
    %680 = vset.pattern.permute.xlu0 0
    %681 = vperm.xlu0 %680, %v560
    %v682 = vpop.permute.xlu0 %681
    %v684 = vmul.f32 %v585, %v647
    %v685 = vmul.f32 %v586, %v652
    %v686 = vmul.f32 %v587, %v657
    %v687 = vmul.f32 %v588, %v662
    %v688 = vmul.f32 %v589, %v667
    %v689 = vmul.f32 %v590, %v672
    %v690 = vmul.f32 %v591, %v677
    %v691 = vmul.f32 %v592, %v682
    %v692 = vsel %vm593, %v684, 0.0
    %v693 = vsel %vm593, %v685, 0.0
    %v694 = vadd.f32 %v692, %v693
    %v695 = vsel %vm593, %v686, 0.0
    %v696 = vadd.f32 %v694, %v695
    %v697 = vsel %vm593, %v687, 0.0
    %v698 = vadd.f32 %v696, %v697
    %v699 = vsel %vm593, %v688, 0.0
    %v700 = vadd.f32 %v698, %v699
    %v701 = vsel %vm593, %v689, 0.0
    %v702 = vadd.f32 %v700, %v701
    %v703 = vsel %vm593, %v690, 0.0
    %v704 = vadd.f32 %v702, %v703
    %v705 = vsel %vm593, %v691, 0.0
    %v706 = vadd.f32 %v704, %v705
    %v707 = vrot.slane %v706, 4
    %v708 = vadd.f32 %v706, %v707
    %v709 = vrot.slane %v708, 2
    %v710 = vadd.f32 %v708, %v709
    %v711 = vrot.slane %v710, 1
    %v712 = vadd.f32 %v710, %v711
    %vm713 = vcmask 1040384
    %v714 = vsel %vm713, %v614, %v643
    %vm715 = vcmask 1041408
    %v716 = vsel %vm715, %v714, %v712
    %v717 = vld [vmem:[#allocation2] sm:$0x7]
    %v718 = vadd.f32 %v717, %v716
    %vm719 = vcmask 124928
    %720 = vst.msk [vmem:[#allocation2] sm:$0x7] %vm719, %v718
    // Predicated region
    $region14: #{tpu_custom_call.1} parent=1 // pred_check
      _
    $region15: #{tpu_custom_call.1} parent=1 // pred_check_branch
      %722 = sbr.rel (0) target = $region17
    $region16: #{tpu_custom_call.1} parent=1 // pred_region
      %s724 = ssub.s32 64, 64
      %725 = vsyncadd [#allocation3], %s724
      %s727 = sshll.u32 [#allocation2], 4
      %s728 = int_to_ptr.vmem [resolvable:$true] %s727
      %730 = dma.vmem_to_hbm [thread:$0]  %s728, 64, %s2, [#allocation3]
    $region17: #{tpu_custom_call.1} parent=1 // pred_fallthru
      _
    // Predicated region
    $region18: #{tpu_custom_call.1} parent=1 // pred_check
      _
    $region19: #{tpu_custom_call.1} parent=1 // pred_check_branch
      %732 = sbr.rel (0) target = $region21
    $region20: #{tpu_custom_call.1} parent=1 // pred_region
      %733 = dma.done [#allocation3], 64
    $region21: #{tpu_custom_call.1} parent=1 // pred_fallthru
      _
    %734 = vsyncpa [#allocation3], 1

</llo_original>
